<compile_context>
chip_gen: v7x
topology: tpu7x:2x2x1
jax: 0.10.0
libtpu: 0.0.40
codegen_flags: <defaults>
</compile_context>

<pallas_src>
import functools

import jax
import jax.numpy as jnp
from jax.experimental import pallas as pl
from jax.experimental.pallas import tpu as pltpu

Z_DIM = 128     # default z_dim of Mapping_style
DEPTH = 3       # depth > 1 so the Linear+LeakyReLU path actually runs
LINEAR = 0      # linear == 0 -> LeakyReLU(0.2) after every Linear
NEG_SLOPE = 0.2


# ---------------- Pallas kernel ----------------

def _linear_act_kernel(x_ref, w_ref, b_ref, o_ref, acc_ref, *, apply_lrelu):
    """One (tm, tn) output tile of y = act(x @ w + b), reduced over the K grid axis."""
    k = pl.program_id(2)

    @pl.when(k == 0)
    def _():
        acc_ref[...] = jnp.zeros_like(acc_ref)

    # bf16 x bf16 -> f32 accumulate on the MXU.
    acc_ref[...] += jnp.dot(x_ref[...], w_ref[...],
                            preferred_element_type=jnp.float32)

    # Bias + LeakyReLU only after the full K reduction (numerically required).
    @pl.when(k == pl.num_programs(2) - 1)
    def _():
        acc = acc_ref[...] + b_ref[...].astype(jnp.float32)   # (1, tn) broadcast
        if apply_lrelu:
            acc = jnp.where(acc >= 0, acc, NEG_SLOPE * acc)
        o_ref[...] = acc.astype(o_ref.dtype)


def linear_act(x, w_t, b, *, apply_lrelu, tm=256, tn=256, tk=256):
    """y = act(x @ w_t + b).  x: (M, K) bf16, w_t: (K, N) bf16, b: (N,) f32 -> (M, N) f32."""
    M, K = x.shape
    K2, N = w_t.shape
    assert K == K2
    tm, tn, tk = min(tm, M), min(tn, N), min(tk, K)
    assert M % tm == 0 and N % tn == 0 and K % tk == 0, "shapes must tile evenly"
    grid = (M // tm, N // tn, K // tk)

    kernel = functools.partial(_linear_act_kernel, apply_lrelu=apply_lrelu)
    return pl.pallas_call(
        kernel,
        out_shape=jax.ShapeDtypeStruct((M, N), jnp.float32),
        grid_spec=pltpu.PrefetchScalarGridSpec(
            num_scalar_prefetch=0,
            grid=grid,
            in_specs=[
                pl.BlockSpec((tm, tk), lambda i, j, k: (i, k)),   # activations
                pl.BlockSpec((tk, tn), lambda i, j, k: (k, j)),   # weights (pre-transposed)
                pl.BlockSpec((1, tn), lambda i, j, k: (0, j)),    # bias row
            ],
            out_specs=pl.BlockSpec((tm, tn), lambda i, j, k: (i, j)),
            scratch_shapes=[pltpu.VMEM((tm, tn), jnp.float32)],
        ),
        compiler_params=pltpu.CompilerParams(
            dimension_semantics=("parallel", "parallel", "arbitrary"),
            vmem_limit_bytes=32 * 1024 * 1024,   # small tiles; safe on v5e/v6e/v7x
        ),
    )(x, w_t, b.reshape(1, N))


# ---------------- Parameters & forward ----------------

def init_params(key, z_dim=Z_DIM, depth=DEPTH):
    """(depth - 1) Linear(z_dim, z_dim) layers. Weights stored pre-transposed (K, N) in bf16."""
    layers = []
    for d in range(depth - 1):
        kw, kb, key = jax.random.split(key, 3)
        # PyTorch nn.Linear: weight (out, in), y = z @ W.T + b. Store W.T once at init.
        w = jax.random.normal(kw, (z_dim, z_dim), jnp.float32) * 0.05
        b = jax.random.normal(kb, (z_dim,), jnp.float32) * 0.05
        layers.append({"w_t": w.T.astype(jnp.bfloat16), "b": b})
    return {"layers": layers}


def mapping_style_forward(params, z, *, linear=LINEAR):
    h = z
    for layer in params["layers"]:
        h = linear_act(h.astype(jnp.bfloat16), layer["w_t"], layer["b"],
                       apply_lrelu=(linear == 0))
    return h  # depth == 1 -> identity, matching the empty nn.Sequential


if __name__ == "__main__":
    key = jax.random.PRNGKey(0)
    k_params, k_z = jax.random.split(key)
    params = init_params(k_params, z_dim=Z_DIM, depth=DEPTH)
    z = jax.random.normal(k_z, (8, Z_DIM), jnp.float32)   # (batch=8, z_dim=128)

    fwd = jax.jit(functools.partial(mapping_style_forward, linear=LINEAR))
    out = fwd(params, z)
    jax.block_until_ready(out)
    assert out.shape == (8, Z_DIM) and out.dtype == jnp.float32
    print("KERNEL_OK")
</pallas_src>

<mosaic_0001>
module attributes {stable_mosaic.version = 11 : i64} {
  func.func @_linear_act_kernel(%arg0: i32, %arg1: i32, %arg2: i32, %arg3: memref<8x128xbf16, #tpu.memory_space<vmem>>, %arg4: memref<128x128xbf16, #tpu.memory_space<vmem>>, %arg5: memref<1x128xf32, #tpu.memory_space<vmem>>, %arg6: memref<8x128xf32, #tpu.memory_space<vmem>>, %arg7: memref<8x128xf32, #tpu.memory_space<vmem>>) attributes {dimension_semantics = [#tpu.dimension_semantics<parallel>, #tpu.dimension_semantics<parallel>, #tpu.dimension_semantics<arbitrary>], iteration_bounds = array<i64: 1, 1, 1>, scalar_prefetch = 0 : i64, scratch_operands = 1 : i64, tpu.core_type = #tpu.core_type<tc>, window_params = [{transform_indices = @transform_0, window_bounds = array<i64: 8, 128>}, {transform_indices = @transform_1, window_bounds = array<i64: 128, 128>}, {transform_indices = @transform_2, window_bounds = array<i64: 1, 128>}, {transform_indices = @transform_3, window_bounds = array<i64: 8, 128>}]} {
    %c0_i32 = arith.constant 0 : i32
    %0 = arith.cmpi eq, %arg2, %c0_i32 : i32
    %1 = arith.extui %0 : i1 to i32
    %c0_i32_0 = arith.constant 0 : i32
    %2 = arith.cmpi ne, %1, %c0_i32_0 : i32
    scf.if %2 {
      %cst_10 = arith.constant 0.000000e+00 : f32
      %12 = vector.broadcast %cst_10 : f32 to vector<8x128xf32>
      %c0_11 = arith.constant 0 : index
      %c0_12 = arith.constant 0 : index
      %13 = vector.load %arg7[%c0_11, %c0_12] : memref<8x128xf32, #tpu.memory_space<vmem>>, vector<8x128xf32>
      tpu.vector_store %arg7[%c0_11, %c0_12], %12 {strides = array<i32>} : memref<8x128xf32, #tpu.memory_space<vmem>>, vector<8x128xf32>,
    } else {
    }
    %c0 = arith.constant 0 : index
    %c0_1 = arith.constant 0 : index
    %3 = vector.load %arg7[%c0, %c0_1] : memref<8x128xf32, #tpu.memory_space<vmem>>, vector<8x128xf32>
    %c0_2 = arith.constant 0 : index
    %c0_3 = arith.constant 0 : index
    %4 = vector.load %arg3[%c0_2, %c0_3] : memref<8x128xbf16, #tpu.memory_space<vmem>>, vector<8x128xbf16>
    %c0_4 = arith.constant 0 : index
    %c0_5 = arith.constant 0 : index
    %5 = vector.load %arg4[%c0_4, %c0_5] : memref<128x128xbf16, #tpu.memory_space<vmem>>, vector<128x128xbf16>
    %cst = arith.constant dense<0.000000e+00> : vector<8x128xf32>
    %6 = tpu.matmul %4, %5, %cst {dimension_numbers = #tpu.dot_dimension_numbers<[1], [0], [0], [1], [0, 0, 1, 1], [], []>} : vector<8x128xbf16>, vector<128x128xbf16>, vector<8x128xf32> -> vector<8x128xf32>
    %7 = arith.addf %3, %6 : vector<8x128xf32>
    %c0_6 = arith.constant 0 : index
    %c0_7 = arith.constant 0 : index
    %8 = vector.load %arg7[%c0_6, %c0_7] : memref<8x128xf32, #tpu.memory_space<vmem>>, vector<8x128xf32>
    tpu.vector_store %arg7[%c0_6, %c0_7], %7 {strides = array<i32>} : memref<8x128xf32, #tpu.memory_space<vmem>>, vector<8x128xf32>,
    %c0_i32_8 = arith.constant 0 : i32
    %9 = arith.cmpi eq, %arg2, %c0_i32_8 : i32
    %10 = arith.extui %9 : i1 to i32
    %c0_i32_9 = arith.constant 0 : i32
    %11 = arith.cmpi ne, %10, %c0_i32_9 : i32
    scf.if %11 {
      %c0_10 = arith.constant 0 : index
      %c0_11 = arith.constant 0 : index
      %12 = vector.load %arg7[%c0_10, %c0_11] : memref<8x128xf32, #tpu.memory_space<vmem>>, vector<8x128xf32>
      %c0_12 = arith.constant 0 : index
      %c0_13 = arith.constant 0 : index
      %13 = vector.load %arg5[%c0_12, %c0_13] : memref<1x128xf32, #tpu.memory_space<vmem>>, vector<1x128xf32>
      %14 = vector.broadcast %13 : vector<1x128xf32> to vector<8x128xf32>
      %15 = arith.addf %12, %14 : vector<8x128xf32>
      %cst_14 = arith.constant 0.000000e+00 : f32
      %16 = vector.broadcast %cst_14 : f32 to vector<8x128xf32>
      %17 = arith.cmpf oge, %15, %16 : vector<8x128xf32>
      %cst_15 = arith.constant 2.000000e-01 : f32
      %18 = vector.broadcast %cst_15 : f32 to vector<8x128xf32>
      %19 = arith.mulf %18, %15 : vector<8x128xf32>
      %20 = arith.select %17, %15, %19 : vector<8x128xi1>, vector<8x128xf32>
      %c0_16 = arith.constant 0 : index
      %c0_17 = arith.constant 0 : index
      %21 = vector.load %arg6[%c0_16, %c0_17] : memref<8x128xf32, #tpu.memory_space<vmem>>, vector<8x128xf32>
      tpu.vector_store %arg6[%c0_16, %c0_17], %20 {strides = array<i32>} : memref<8x128xf32, #tpu.memory_space<vmem>>, vector<8x128xf32>,
    } else {
    }
    return
  }
  func.func @transform_0(%arg0: i32, %arg1: i32, %arg2: i32) -> (i32, i32) {
    %c0_i32 = arith.constant 0 : i32
    return %arg0, %arg2 : i32, i32
  }
  func.func @transform_1(%arg0: i32, %arg1: i32, %arg2: i32) -> (i32, i32) {
    %c0_i32 = arith.constant 0 : i32
    return %arg2, %arg1 : i32, i32
  }
  func.func @transform_2(%arg0: i32, %arg1: i32, %arg2: i32) -> (i32, i32) {
    %c0_i32 = arith.constant 0 : i32
    %c0_i32_0 = arith.constant 0 : i32
    return %c0_i32, %arg1 : i32, i32
  }
  func.func @transform_3(%arg0: i32, %arg1: i32, %arg2: i32) -> (i32, i32) {
    %c0_i32 = arith.constant 0 : i32
    return %arg0, %arg1 : i32, i32
  }
}

module attributes {stable_mosaic.version = 11 : i64} {
  func.func @_linear_act_kernel(%arg0: i32, %arg1: i32, %arg2: i32, %arg3: memref<8x128xbf16, #tpu.memory_space<vmem>>, %arg4: memref<128x128xbf16, #tpu.memory_space<vmem>>, %arg5: memref<1x128xf32, #tpu.memory_space<vmem>>, %arg6: memref<8x128xf32, #tpu.memory_space<vmem>>, %arg7: memref<8x128xf32, #tpu.memory_space<vmem>>) attributes {dimension_semantics = [#tpu.dimension_semantics<parallel>, #tpu.dimension_semantics<parallel>, #tpu.dimension_semantics<arbitrary>], iteration_bounds = array<i64: 1, 1, 1>, scalar_prefetch = 0 : i64, scratch_operands = 1 : i64, tpu.core_type = #tpu.core_type<tc>, window_params = [{transform_indices = @transform_0, window_bounds = array<i64: 8, 128>}, {transform_indices = @transform_1, window_bounds = array<i64: 128, 128>}, {transform_indices = @transform_2, window_bounds = array<i64: 1, 128>}, {transform_indices = @transform_3, window_bounds = array<i64: 8, 128>}]} {
    %c0_i32 = arith.constant 0 : i32
    %0 = arith.cmpi eq, %arg2, %c0_i32 : i32
    %1 = arith.extui %0 : i1 to i32
    %c0_i32_0 = arith.constant 0 : i32
    %2 = arith.cmpi ne, %1, %c0_i32_0 : i32
    scf.if %2 {
      %cst_10 = arith.constant 0.000000e+00 : f32
      %12 = vector.broadcast %cst_10 : f32 to vector<8x128xf32>
      %c0_11 = arith.constant 0 : index
      %c0_12 = arith.constant 0 : index
      %13 = vector.load %arg7[%c0_11, %c0_12] : memref<8x128xf32, #tpu.memory_space<vmem>>, vector<8x128xf32>
      tpu.vector_store %arg7[%c0_11, %c0_12], %12 {strides = array<i32>} : memref<8x128xf32, #tpu.memory_space<vmem>>, vector<8x128xf32>,
    } else {
    }
    %c0 = arith.constant 0 : index
    %c0_1 = arith.constant 0 : index
    %3 = vector.load %arg7[%c0, %c0_1] : memref<8x128xf32, #tpu.memory_space<vmem>>, vector<8x128xf32>
    %c0_2 = arith.constant 0 : index
    %c0_3 = arith.constant 0 : index
    %4 = vector.load %arg3[%c0_2, %c0_3] : memref<8x128xbf16, #tpu.memory_space<vmem>>, vector<8x128xbf16>
    %c0_4 = arith.constant 0 : index
    %c0_5 = arith.constant 0 : index
    %5 = vector.load %arg4[%c0_4, %c0_5] : memref<128x128xbf16, #tpu.memory_space<vmem>>, vector<128x128xbf16>
    %cst = arith.constant dense<0.000000e+00> : vector<8x128xf32>
    %6 = tpu.matmul %4, %5, %cst {dimension_numbers = #tpu.dot_dimension_numbers<[1], [0], [0], [1], [0, 0, 1, 1], [], []>} : vector<8x128xbf16>, vector<128x128xbf16>, vector<8x128xf32> -> vector<8x128xf32>
    %7 = arith.addf %3, %6 : vector<8x128xf32>
    %c0_6 = arith.constant 0 : index
    %c0_7 = arith.constant 0 : index
    %8 = vector.load %arg7[%c0_6, %c0_7] : memref<8x128xf32, #tpu.memory_space<vmem>>, vector<8x128xf32>
    tpu.vector_store %arg7[%c0_6, %c0_7], %7 {strides = array<i32>} : memref<8x128xf32, #tpu.memory_space<vmem>>, vector<8x128xf32>,
    %c0_i32_8 = arith.constant 0 : i32
    %9 = arith.cmpi eq, %arg2, %c0_i32_8 : i32
    %10 = arith.extui %9 : i1 to i32
    %c0_i32_9 = arith.constant 0 : i32
    %11 = arith.cmpi ne, %10, %c0_i32_9 : i32
    scf.if %11 {
      %c0_10 = arith.constant 0 : index
      %c0_11 = arith.constant 0 : index
      %12 = vector.load %arg7[%c0_10, %c0_11] : memref<8x128xf32, #tpu.memory_space<vmem>>, vector<8x128xf32>
      %c0_12 = arith.constant 0 : index
      %c0_13 = arith.constant 0 : index
      %13 = vector.load %arg5[%c0_12, %c0_13] : memref<1x128xf32, #tpu.memory_space<vmem>>, vector<1x128xf32>
      %14 = vector.broadcast %13 : vector<1x128xf32> to vector<8x128xf32>
      %15 = arith.addf %12, %14 : vector<8x128xf32>
      %cst_14 = arith.constant 0.000000e+00 : f32
      %16 = vector.broadcast %cst_14 : f32 to vector<8x128xf32>
      %17 = arith.cmpf oge, %15, %16 : vector<8x128xf32>
      %cst_15 = arith.constant 2.000000e-01 : f32
      %18 = vector.broadcast %cst_15 : f32 to vector<8x128xf32>
      %19 = arith.mulf %18, %15 : vector<8x128xf32>
      %20 = arith.select %17, %15, %19 : vector<8x128xi1>, vector<8x128xf32>
      %c0_16 = arith.constant 0 : index
      %c0_17 = arith.constant 0 : index
      %21 = vector.load %arg6[%c0_16, %c0_17] : memref<8x128xf32, #tpu.memory_space<vmem>>, vector<8x128xf32>
      tpu.vector_store %arg6[%c0_16, %c0_17], %20 {strides = array<i32>} : memref<8x128xf32, #tpu.memory_space<vmem>>, vector<8x128xf32>,
    } else {
    }
    return
  }
  func.func @transform_0(%arg0: i32, %arg1: i32, %arg2: i32) -> (i32, i32) {
    %c0_i32 = arith.constant 0 : i32
    return %arg0, %arg2 : i32, i32
  }
  func.func @transform_1(%arg0: i32, %arg1: i32, %arg2: i32) -> (i32, i32) {
    %c0_i32 = arith.constant 0 : i32
    return %arg2, %arg1 : i32, i32
  }
  func.func @transform_2(%arg0: i32, %arg1: i32, %arg2: i32) -> (i32, i32) {
    %c0_i32 = arith.constant 0 : i32
    %c0_i32_0 = arith.constant 0 : i32
    return %c0_i32, %arg1 : i32, i32
  }
  func.func @transform_3(%arg0: i32, %arg1: i32, %arg2: i32) -> (i32, i32) {
    %c0_i32 = arith.constant 0 : i32
    return %arg0, %arg1 : i32, i32
  }
}

</mosaic_0001>

<llo_original>
// kernel: mapping_style_forward.2
$region0: #{mapping_style_forward.2}
  #allocation0 [shape = 'u32[]', space=smem, size = 0x4, offset = 0x4, fixed_abs, tag = 'smem constant byte address 0x4 - core index']
  #allocation1 [shape = 'u32[144,128]{1,0:T(1,128)}', space=vmem, size = 0x12000, scoped, tag = 'internal scratch']
  #allocation2 [shape = 'f32[8,128]{1,0:T(8,128)}', space=vmem, size = 0x1000, scoped, tag = 'scratch operand']
  %s0 = inlined_call_operand.vmem [shape: bf16[8,128], index: 0, kind: input, shape index: {}]
  %s1 = inlined_call_operand.hbm [shape: bf16[128,128], index: 1, kind: input, shape index: {}]
  %s2 = inlined_call_operand.hbm [shape: f32[1,128], index: 2, kind: input, shape index: {}]
  %s3 = inlined_call_operand.vmem [shape: f32[8,128], index: 3, kind: output, shape index: {}]
  %s4 = sld [smem:[#allocation0]]
  $region38: #{mapping_style_forward.2} parent=0
    _
  %s6 = ssub.s32 1, %s4
  %s7 = scalar_select 0, %s6, %s4
  $region1: #{mapping_style_forward.2} parent=0
    #allocation3 [shape = 'u8[32768]{0}', space=vmem, size = 0x8000, scoped, tag = 'input window, operand 1, single buffered']
    #allocation4 [shape = 's32[1]{0}', space=sflag, size = 0x4, scoped, tag = 'scoped memory for mapping_style_forward.2']
    #allocation5 [shape = 'u8[512]{0}', space=vmem, size = 0x400, scoped, tag = 'input window, operand 2, single buffered']
    #allocation6 [shape = 's32[1]{0}', space=sflag, size = 0x4, scoped, tag = 'scoped memory for mapping_style_forward.2']
    %8 = vsyncpa [#allocation4], 0
    %9 = vsyncpa [#allocation6], 0
    // Predicated region
    $region2: #{mapping_style_forward.2} parent=1 // pred_check
      _
    $region3: #{mapping_style_forward.2} parent=1 // pred_check_branch
      %11 = sbr.rel (0) target = $region5
    $region4: #{mapping_style_forward.2} parent=1 // pred_region
      _
    $region5: #{mapping_style_forward.2} parent=1 // pred_fallthru
      _
    // Predicated region
    $region6: #{mapping_style_forward.2} parent=1 // pred_check
      _
    $region7: #{mapping_style_forward.2} parent=1 // pred_check_branch
      %13 = sbr.rel (0) target = $region9
    $region8: #{mapping_style_forward.2} parent=1 // pred_region
      %s15 = ssub.s32 1024, 1024
      %16 = vsyncadd [#allocation4], %s15
      %s17 = sshll.u32 [#allocation3], 4
      %s18 = int_to_ptr.vmem [resolvable:$true] %s17
      %23 = dma.hbm_to_vmem [thread:$0]  %s1, 1024, %s18, [#allocation4], 64, 64, 4
    $region9: #{mapping_style_forward.2} parent=1 // pred_fallthru
      _
    // Predicated region
    $region10: #{mapping_style_forward.2} parent=1 // pred_check
      _
    $region11: #{mapping_style_forward.2} parent=1 // pred_check_branch
      %25 = sbr.rel (0) target = $region13
    $region12: #{mapping_style_forward.2} parent=1 // pred_region
      %s27 = ssub.s32 16, 16
      %28 = vsyncadd [#allocation6], %s27
      %s30 = sshll.u32 [#allocation5], 4
      %s31 = int_to_ptr.vmem [resolvable:$true] %s30
      %33 = dma.hbm_to_vmem [thread:$0]  %s2, 16, %s31, [#allocation6]
    $region13: #{mapping_style_forward.2} parent=1 // pred_fallthru
      _
    // Predicated region
    $region14: #{mapping_style_forward.2} parent=1 // pred_check
      _
    $region15: #{mapping_style_forward.2} parent=1 // pred_check_branch
      %35 = sbr.rel (0) target = $region17
    $region16: #{mapping_style_forward.2} parent=1 // pred_region
      %36 = dma.done [#allocation4], 1024
    $region17: #{mapping_style_forward.2} parent=1 // pred_fallthru
      _
    // Predicated region
    $region18: #{mapping_style_forward.2} parent=1 // pred_check
      _
    $region19: #{mapping_style_forward.2} parent=1 // pred_check_branch
      %38 = sbr.rel (0) target = $region21
    $region20: #{mapping_style_forward.2} parent=1 // pred_region
      %39 = dma.done [#allocation6], 16
    $region21: #{mapping_style_forward.2} parent=1 // pred_fallthru
      _
    %p41 = scmp.eq.s32.totalorder 0, 0
    // Predicated region
    $region22: #{mapping_style_forward.2} parent=1 // pred_check
      %p42 = pneg %p41
    $region23: #{mapping_style_forward.2} parent=1 // pred_check_branch
      %44 = sbr.rel (%p42) target = $region25
    $region24: #{mapping_style_forward.2} parent=1 // pred_region
      %45 = vst [vmem:[#allocation2] sm:$0xff] 0.0
    $region25: #{mapping_style_forward.2} parent=1 // pred_fallthru
      _
    %v46 = vld [vmem:[#allocation2] sm:$0xff]
    %v47 = vld [vmem:[%s0] sm:$0xf]
    %v48 = vld [vmem:[#allocation3] sm:$0xf]
    %v49 = vld [vmem:[#allocation3 + $0x4] sm:$0xf]
    %v50 = vld [vmem:[#allocation3 + $0x8] sm:$0xf]
    %v51 = vld [vmem:[#allocation3 + $0xc] sm:$0xf]
    %v52 = vld [vmem:[#allocation3 + $0x10] sm:$0xf]
    %v53 = vld [vmem:[#allocation3 + $0x14] sm:$0xf]
    %v54 = vld [vmem:[#allocation3 + $0x18] sm:$0xf]
    %v55 = vld [vmem:[#allocation3 + $0x1c] sm:$0xf]
    %v56 = vld [vmem:[#allocation3 + $0x20] sm:$0xf]
    %v57 = vld [vmem:[#allocation3 + $0x24] sm:$0xf]
    %v58 = vld [vmem:[#allocation3 + $0x28] sm:$0xf]
    %v59 = vld [vmem:[#allocation3 + $0x2c] sm:$0xf]
    %v60 = vld [vmem:[#allocation3 + $0x30] sm:$0xf]
    %v61 = vld [vmem:[#allocation3 + $0x34] sm:$0xf]
    %v62 = vld [vmem:[#allocation3 + $0x38] sm:$0xf]
    %v63 = vld [vmem:[#allocation3 + $0x3c] sm:$0xf]
    %v80 = vunpack.c.l.b16 %v48
    %v81 = vunpack.c.l.b16 %v49
    %v82 = vunpack.c.l.b16 %v50
    %v83 = vunpack.c.l.b16 %v51
    %v84 = vunpack.c.l.b16 %v52
    %v85 = vunpack.c.l.b16 %v53
    %v86 = vunpack.c.l.b16 %v54
    %v87 = vunpack.c.l.b16 %v55
    %v88 = vunpack.c.l.b16 %v56
    %v89 = vunpack.c.l.b16 %v57
    %v90 = vunpack.c.l.b16 %v58
    %v91 = vunpack.c.l.b16 %v59
    %v92 = vunpack.c.l.b16 %v60
    %v93 = vunpack.c.l.b16 %v61
    %v94 = vunpack.c.l.b16 %v62
    %v95 = vunpack.c.l.b16 %v63
    %v96 = vpack.c.b16 %v81, %v80
    %v97 = vpack.c.b16 %v83, %v82
    %v98 = vpack.c.b16 %v85, %v84
    %v99 = vpack.c.b16 %v87, %v86
    %v100 = vpack.c.b16 %v89, %v88
    %v101 = vpack.c.b16 %v91, %v90
    %v102 = vpack.c.b16 %v93, %v92
    %v103 = vpack.c.b16 %v95, %v94
    %112 = vmatprep.subr.bf16.mxu0 0
    %113 = vmatpush1.bf16.msra.mxu0 %v96
    %114 = vmatprep.subr.bf16.mxu0 0
    %115 = vmatpush1.bf16.msra.mxu0 %v97
    %116 = vmatprep.subr.bf16.mxu0 0
    %117 = vmatpush1.bf16.msra.mxu0 %v98
    %118 = vmatprep.subr.bf16.mxu0 0
    %119 = vmatpush1.bf16.msra.mxu0 %v99
    %120 = vmatprep.subr.bf16.mxu0 0
    %121 = vmatpush1.bf16.msra.mxu0 %v100
    %122 = vmatprep.subr.bf16.mxu0 0
    %123 = vmatpush1.bf16.msra.mxu0 %v101
    %124 = vmatprep.subr.bf16.mxu0 0
    %125 = vmatpush1.bf16.msra.mxu0 %v102
    %126 = vmatprep.subr.bf16.mxu0 0
    %127 = vmatpush1.bf16.msra.mxu0 %v103
    %128 = vmatprep.subr.bf16.mxu0 0
    %129 = vmatpush1.bf16.msra.mxu0 0
    %130 = vmatprep.subr.bf16.mxu0 0
    %131 = vmatpush1.bf16.msra.mxu0 0
    %132 = vmatprep.subr.bf16.mxu0 0
    %133 = vmatpush1.bf16.msra.mxu0 0
    %134 = vmatprep.subr.bf16.mxu0 0
    %135 = vmatpush1.bf16.msra.mxu0 0
    %136 = vmatprep.subr.bf16.mxu0 0
    %137 = vmatpush1.bf16.msra.mxu0 0
    %138 = vmatprep.subr.bf16.mxu0 0
    %139 = vmatpush1.bf16.msra.mxu0 0
    %140 = vmatprep.subr.bf16.mxu0 0
    %141 = vmatpush1.bf16.msra.mxu0 0
    %142 = vmatprep.subr.bf16.mxu0 0
    %143 = vmatpush1.bf16.msra.mxu0 0
    %144 = vmatprep.mubr.bf16.mxu0 0
    %145 = vmatmul.mubr.bf16.gmra.mrb[0].mxu0 %v47
    %v146 = vpop.f32.mrb[0].mxu0
    %v147 = vadd.f32 0.0, %v146
    %v148 = vpop.f32.mrb[0].mxu0
    %v149 = vpop.f32.mrb[0].mxu0
    %v150 = vpop.f32.mrb[0].mxu0
    %151 = vdwg.mxu0
    %v152 = vadd.f32 %v46, %v147
    %153 = vst [vmem:[#allocation2] sm:$0xff] %v152
    // Predicated region
    $region26: #{mapping_style_forward.2} parent=1 // pred_check
      %p154 = pneg %p41
    $region27: #{mapping_style_forward.2} parent=1 // pred_check_branch
      %156 = sbr.rel (%p154) target = $region29
    $region28: #{mapping_style_forward.2} parent=1 // pred_region
      %v157 = vld [vmem:[#allocation2] sm:$0xff]
      %v158 = vld [vmem:[#allocation5] sm:$0x1]
      %v160 = vlaneseq
      %v161 = vshrl.u32 %v160, 7
      %v162 = vsub.s32 0, %v161
      %v163 = vrot.slane %v158, %v162
      %v165 = vadd.f32 %v157, %v163
      %vm166 = vcmp.ge.f32.partialorder %v165, 0.0
      %v167 = vmul.f32 %v165, 0.2
      %v168 = vsel %vm166, %v165, %v167
      %169 = vst [vmem:[%s3] sm:$0xff] %v168
    $region29: #{mapping_style_forward.2} parent=1 // pred_fallthru
      _
    // Predicated region
    $region30: #{mapping_style_forward.2} parent=1 // pred_check
      _
    $region31: #{mapping_style_forward.2} parent=1 // pred_check_branch
      %171 = sbr.rel (0) target = $region33
    $region32: #{mapping_style_forward.2} parent=1 // pred_region
      _
    $region33: #{mapping_style_forward.2} parent=1 // pred_fallthru
      _
    // Predicated region
    $region34: #{mapping_style_forward.2} parent=1 // pred_check
      _
    $region35: #{mapping_style_forward.2} parent=1 // pred_check_branch
      %173 = sbr.rel (0) target = $region37
    $region36: #{mapping_style_forward.2} parent=1 // pred_region
      _
    $region37: #{mapping_style_forward.2} parent=1 // pred_fallthru
      _
    %174 = vsyncpa [#allocation4], 1
    %175 = vsyncpa [#allocation6], 1

// kernel: mapping_style_forward.3
$region0: #{mapping_style_forward.3}
  #allocation0 [shape = 'u32[]', space=smem, size = 0x4, offset = 0x4, fixed_abs, tag = 'smem constant byte address 0x4 - core index']
  #allocation1 [shape = 'u32[144,128]{1,0:T(1,128)}', space=vmem, size = 0x12000, scoped, tag = 'internal scratch']
  #allocation2 [shape = 'f32[8,128]{1,0:T(8,128)}', space=vmem, size = 0x1000, scoped, tag = 'scratch operand']
  %s0 = inlined_call_operand.vmem [shape: bf16[8,128], index: 0, kind: input, shape index: {}]
  %s1 = inlined_call_operand.vmem [shape: bf16[128,128], index: 1, kind: input, shape index: {}]
  %s2 = inlined_call_operand.vmem [shape: f32[1,128], index: 2, kind: input, shape index: {}]
  %s3 = inlined_call_operand.hbm [shape: f32[8,128], index: 3, kind: output, shape index: {}]
  %s4 = sld [smem:[#allocation0]]
  $region30: #{mapping_style_forward.3} parent=0
    _
  %s6 = ssub.s32 1, %s4
  %s7 = scalar_select 0, %s6, %s4
  $region1: #{mapping_style_forward.3} parent=0
    #allocation3 [shape = 'u8[4096]{0}', space=vmem, size = 0x1000, scoped, tag = 'output window, operand 0, single buffered']
    #allocation4 [shape = 's32[1]{0}', space=sflag, size = 0x4, scoped, tag = 'scoped memory for mapping_style_forward.3']
    %8 = vsyncpa [#allocation4], 0
    // Predicated region
    $region2: #{mapping_style_forward.3} parent=1 // pred_check
      _
    $region3: #{mapping_style_forward.3} parent=1 // pred_check_branch
      %10 = sbr.rel (0) target = $region5
    $region4: #{mapping_style_forward.3} parent=1 // pred_region
      _
    $region5: #{mapping_style_forward.3} parent=1 // pred_fallthru
      _
    // Predicated region
    $region6: #{mapping_style_forward.3} parent=1 // pred_check
      _
    $region7: #{mapping_style_forward.3} parent=1 // pred_check_branch
      %12 = sbr.rel (0) target = $region9
    $region8: #{mapping_style_forward.3} parent=1 // pred_region
      _
    $region9: #{mapping_style_forward.3} parent=1 // pred_fallthru
      _
    // Predicated region
    $region10: #{mapping_style_forward.3} parent=1 // pred_check
      _
    $region11: #{mapping_style_forward.3} parent=1 // pred_check_branch
      %14 = sbr.rel (0) target = $region13
    $region12: #{mapping_style_forward.3} parent=1 // pred_region
      _
    $region13: #{mapping_style_forward.3} parent=1 // pred_fallthru
      _
    %p16 = scmp.eq.s32.totalorder 0, 0
    // Predicated region
    $region14: #{mapping_style_forward.3} parent=1 // pred_check
      %p17 = pneg %p16
    $region15: #{mapping_style_forward.3} parent=1 // pred_check_branch
      %19 = sbr.rel (%p17) target = $region17
    $region16: #{mapping_style_forward.3} parent=1 // pred_region
      %20 = vst [vmem:[#allocation2] sm:$0xff] 0.0
    $region17: #{mapping_style_forward.3} parent=1 // pred_fallthru
      _
    %v21 = vld [vmem:[#allocation2] sm:$0xff]
    %v22 = vld [vmem:[%s0] sm:$0xf]
    %v23 = vld [vmem:[%s1] sm:$0xf]
    %v24 = vld [vmem:[%s1 + $0x4] sm:$0xf]
    %v25 = vld [vmem:[%s1 + $0x8] sm:$0xf]
    %v26 = vld [vmem:[%s1 + $0xc] sm:$0xf]
    %v27 = vld [vmem:[%s1 + $0x10] sm:$0xf]
    %v28 = vld [vmem:[%s1 + $0x14] sm:$0xf]
    %v29 = vld [vmem:[%s1 + $0x18] sm:$0xf]
    %v30 = vld [vmem:[%s1 + $0x1c] sm:$0xf]
    %v31 = vld [vmem:[%s1 + $0x20] sm:$0xf]
    %v32 = vld [vmem:[%s1 + $0x24] sm:$0xf]
    %v33 = vld [vmem:[%s1 + $0x28] sm:$0xf]
    %v34 = vld [vmem:[%s1 + $0x2c] sm:$0xf]
    %v35 = vld [vmem:[%s1 + $0x30] sm:$0xf]
    %v36 = vld [vmem:[%s1 + $0x34] sm:$0xf]
    %v37 = vld [vmem:[%s1 + $0x38] sm:$0xf]
    %v38 = vld [vmem:[%s1 + $0x3c] sm:$0xf]
    %v55 = vunpack.c.l.b16 %v23
    %v56 = vunpack.c.l.b16 %v24
    %v57 = vunpack.c.l.b16 %v25
    %v58 = vunpack.c.l.b16 %v26
    %v59 = vunpack.c.l.b16 %v27
    %v60 = vunpack.c.l.b16 %v28
    %v61 = vunpack.c.l.b16 %v29
    %v62 = vunpack.c.l.b16 %v30
    %v63 = vunpack.c.l.b16 %v31
    %v64 = vunpack.c.l.b16 %v32
    %v65 = vunpack.c.l.b16 %v33
    %v66 = vunpack.c.l.b16 %v34
    %v67 = vunpack.c.l.b16 %v35
    %v68 = vunpack.c.l.b16 %v36
    %v69 = vunpack.c.l.b16 %v37
    %v70 = vunpack.c.l.b16 %v38
    %v71 = vpack.c.b16 %v56, %v55
    %v72 = vpack.c.b16 %v58, %v57
    %v73 = vpack.c.b16 %v60, %v59
    %v74 = vpack.c.b16 %v62, %v61
    %v75 = vpack.c.b16 %v64, %v63
    %v76 = vpack.c.b16 %v66, %v65
    %v77 = vpack.c.b16 %v68, %v67
    %v78 = vpack.c.b16 %v70, %v69
    %87 = vmatprep.subr.bf16.mxu0 0
    %88 = vmatpush1.bf16.msra.mxu0 %v71
    %89 = vmatprep.subr.bf16.mxu0 0
    %90 = vmatpush1.bf16.msra.mxu0 %v72
    %91 = vmatprep.subr.bf16.mxu0 0
    %92 = vmatpush1.bf16.msra.mxu0 %v73
    %93 = vmatprep.subr.bf16.mxu0 0
    %94 = vmatpush1.bf16.msra.mxu0 %v74
    %95 = vmatprep.subr.bf16.mxu0 0
    %96 = vmatpush1.bf16.msra.mxu0 %v75
    %97 = vmatprep.subr.bf16.mxu0 0
    %98 = vmatpush1.bf16.msra.mxu0 %v76
    %99 = vmatprep.subr.bf16.mxu0 0
    %100 = vmatpush1.bf16.msra.mxu0 %v77
    %101 = vmatprep.subr.bf16.mxu0 0
    %102 = vmatpush1.bf16.msra.mxu0 %v78
    %103 = vmatprep.subr.bf16.mxu0 0
    %104 = vmatpush1.bf16.msra.mxu0 0
    %105 = vmatprep.subr.bf16.mxu0 0
    %106 = vmatpush1.bf16.msra.mxu0 0
    %107 = vmatprep.subr.bf16.mxu0 0
    %108 = vmatpush1.bf16.msra.mxu0 0
    %109 = vmatprep.subr.bf16.mxu0 0
    %110 = vmatpush1.bf16.msra.mxu0 0
    %111 = vmatprep.subr.bf16.mxu0 0
    %112 = vmatpush1.bf16.msra.mxu0 0
    %113 = vmatprep.subr.bf16.mxu0 0
    %114 = vmatpush1.bf16.msra.mxu0 0
    %115 = vmatprep.subr.bf16.mxu0 0
    %116 = vmatpush1.bf16.msra.mxu0 0
    %117 = vmatprep.subr.bf16.mxu0 0
    %118 = vmatpush1.bf16.msra.mxu0 0
    %119 = vmatprep.mubr.bf16.mxu0 0
    %120 = vmatmul.mubr.bf16.gmra.mrb[0].mxu0 %v22
    %v121 = vpop.f32.mrb[0].mxu0
    %v122 = vadd.f32 0.0, %v121
    %v123 = vpop.f32.mrb[0].mxu0
    %v124 = vpop.f32.mrb[0].mxu0
    %v125 = vpop.f32.mrb[0].mxu0
    %126 = vdwg.mxu0
    %v127 = vadd.f32 %v21, %v122
    %128 = vst [vmem:[#allocation2] sm:$0xff] %v127
    // Predicated region
    $region18: #{mapping_style_forward.3} parent=1 // pred_check
      %p129 = pneg %p16
    $region19: #{mapping_style_forward.3} parent=1 // pred_check_branch
      %131 = sbr.rel (%p129) target = $region21
    $region20: #{mapping_style_forward.3} parent=1 // pred_region
      %v132 = vld [vmem:[#allocation2] sm:$0xff]
      %v133 = vld [vmem:[%s2] sm:$0x1]
      %v135 = vlaneseq
      %v136 = vshrl.u32 %v135, 7
      %v137 = vsub.s32 0, %v136
      %v138 = vrot.slane %v133, %v137
      %v140 = vadd.f32 %v132, %v138
      %vm141 = vcmp.ge.f32.partialorder %v140, 0.0
      %v142 = vmul.f32 %v140, 0.2
      %v143 = vsel %vm141, %v140, %v142
      %144 = vst [vmem:[#allocation3] sm:$0xff] %v143
    $region21: #{mapping_style_forward.3} parent=1 // pred_fallthru
      _
    // Predicated region
    $region22: #{mapping_style_forward.3} parent=1 // pred_check
      _
    $region23: #{mapping_style_forward.3} parent=1 // pred_check_branch
      %146 = sbr.rel (0) target = $region25
    $region24: #{mapping_style_forward.3} parent=1 // pred_region
      %s148 = ssub.s32 128, 128
      %149 = vsyncadd [#allocation4], %s148
      %s151 = sshll.u32 [#allocation3], 4
      %s152 = int_to_ptr.vmem [resolvable:$true] %s151
      %154 = dma.vmem_to_hbm [thread:$0]  %s152, 128, %s3, [#allocation4]
    $region25: #{mapping_style_forward.3} parent=1 // pred_fallthru
      _
    // Predicated region
    $region26: #{mapping_style_forward.3} parent=1 // pred_check
      _
    $region27: #{mapping_style_forward.3} parent=1 // pred_check_branch
      %156 = sbr.rel (0) target = $region29
    $region28: #{mapping_style_forward.3} parent=1 // pred_region
      %157 = dma.done [#allocation4], 128
    $region29: #{mapping_style_forward.3} parent=1 // pred_fallthru
      _
    %158 = vsyncpa [#allocation4], 1

</llo_original>
